<compile_context>
chip_gen: v6e
topology: v6e:2x2x1
jax: 0.10.0
libtpu: 0.0.40
codegen_flags: <defaults>
</compile_context>

<pallas_src>
import functools
import math

import jax
import jax.numpy as jnp
from jax import lax
from jax.experimental import pallas as pl
from jax.experimental.pallas import tpu as pltpu

_LANE = 128


def _round_up(x: int, m: int) -> int:
    return ((x + m - 1) // m) * m


def _vmem_capacity_bytes() -> int:
    try:
        cap = int(pltpu.get_tpu_info().vmem_capacity_bytes)
        if cap > 0:
            return cap
    except Exception:
        pass
    return 64 * 1024 * 1024  # conservative (v7x physical VMEM per TensorCore)


def _per_step_vmem_bytes(t, f_pad, dout_pad, mm_bytes, out_bytes, w_bytes):
    """Approximate per-grid-step VMEM footprint (double-buffered I/O + acc)."""
    return (2 * t * f_pad * mm_bytes        # X tile
            + 2 * t * t * mm_bytes          # A tile
            + 2 * t * 4                     # dq tile
            + 2 * t * dout_pad * out_bytes  # output tile
            + t * f_pad * 4                 # f32 accumulator
            + 2 * w_bytes)                  # resident W


def _pick_node_tile(n, footprint, budget, max_tile=1024):
    """Largest lane-aligned divisor tile of n whose footprint fits the budget."""
    best = None
    t = _LANE
    while t <= min(n, max_tile):
        if n % t == 0 and footprint(t) <= budget:
            best = t
        t += _LANE
    return best


# --------------------------------------------------------------------------
# Kernels: out[q, :] = ReLU( dq[q] * sum_k A[k, q] * X[k, :]  (@ W) )
# --------------------------------------------------------------------------
def _accumulate(a_ref, x_ref, acc_ref, contract_dim):
    @pl.when(pl.program_id(2) == 0)
    def _():
        acc_ref[...] = jnp.zeros_like(acc_ref)

    # A^T aggregation.  contract_dim=0: general path, A tile is A[k-rows, q-cols]
    # (transposed-LHS dot).  contract_dim=1: symmetric path, A tile is the
    # (q, k) block and the dot is in plain (M,K)x(K,N) form (no transpose).
    acc_ref[...] += lax.dot_general(
        a_ref[...], x_ref[...],
        dimension_numbers=(((contract_dim,), (0,)), ((), ())),
        preferred_element_type=jnp.float32)


def _gcn_agg_first_kernel(x_ref, a_ref, w_ref, dq_ref, o_ref, acc_ref, *,
                          contract_dim):
    _accumulate(a_ref, x_ref, acc_ref, contract_dim)

    @pl.when(pl.program_id(2) == pl.num_programs(2) - 1)
    def _():
        # Single small (t, D_in_pad) @ (D_in_pad, D_out_pad) per output tile.
        out = jnp.dot(acc_ref[...], w_ref[...].astype(jnp.float32),
                      preferred_element_type=jnp.float32)
        out = out * dq_ref[...]
        o_ref[...] = jnp.maximum(out, 0.0).astype(o_ref.dtype)


def _gcn_transform_first_kernel(x_ref, a_ref, dq_ref, o_ref, acc_ref, *,
                                contract_dim):
    _accumulate(a_ref, x_ref, acc_ref, contract_dim)

    @pl.when(pl.program_id(2) == pl.num_programs(2) - 1)
    def _():
        out = acc_ref[...] * dq_ref[...]
        o_ref[...] = jnp.maximum(out, 0.0).astype(o_ref.dtype)


# --------------------------------------------------------------------------
# Wrapper
# --------------------------------------------------------------------------
def graph_conv_layer(node_features, adjacency_matrix, weight, *,
                     deg_inv_sqrt=None,
                     matmul_dtype=jnp.bfloat16,
                     assume_symmetric_adjacency=False):
    """node_features: [B, N, D_in], adjacency_matrix: [B, N, N], weight: [D_in, D_out].

    matmul_dtype: dtype of both operands of the N^2 aggregation matmul
      (accumulation is always f32).  Default bf16 (exact for 0/1 adjacency);
      pass jnp.float32 for full-precision aggregation, or None to use the
      promoted input dtype.
    """
    B, N, D_in = node_features.shape
    D_out = weight.shape[1]
    out_dtype = node_features.dtype

    # ---- degrees via plain XLA (fuses upstream; avoids a second Pallas A pass)
    if deg_inv_sqrt is None:
        deg = jnp.sum(adjacency_matrix.astype(jnp.float32), axis=-1,
                      keepdims=True)
        deg_inv_sqrt = lax.rsqrt(jnp.maximum(deg, 1.0))
    deg_inv_sqrt = deg_inv_sqrt.astype(jnp.float32)

    # ---- one MXU dtype; each operand cast exactly once, in the wrapper.
    if matmul_dtype is None:
        mm_dt = jnp.promote_types(adjacency_matrix.dtype, node_features.dtype)
    else:
        mm_dt = jnp.dtype(matmul_dtype)

    aggregate_first = D_in <= D_out

    # ---- pre-scale by d^{-1/2} once per row; for transform-first also apply W
    # once here (one batched XLA matmul instead of once per q tile in-kernel).
    x = node_features.astype(jnp.float32) * deg_inv_sqrt
    if not aggregate_first:
        x = jnp.matmul(x, weight.astype(jnp.float32),
                       precision=lax.Precision.HIGHEST)
    x = x.astype(mm_dt)
    a = adjacency_matrix.astype(mm_dt)

    # ---- lane-dense feature dims (unmasked vst on the output slab).
    F = x.shape[-1]                              # D_in (agg-first) or D_out
    F_pad = _round_up(F, _LANE)
    D_out_pad = _round_up(D_out, _LANE)
    if F_pad != F:
        x = jnp.pad(x, ((0, 0), (0, 0), (0, F_pad - F)))
    w = None
    w_bytes = 0
    if aggregate_first:
        w = weight
        pad_r, pad_c = F_pad - D_in, D_out_pad - D_out
        if pad_r or pad_c:
            w = jnp.pad(w, ((0, pad_r), (0, pad_c)))
        w_bytes = F_pad * D_out_pad * w.dtype.itemsize

    # ---- VMEM-aware node tiling + explicit vmem limit (generation aware).
    mm_bytes = jnp.dtype(mm_dt).itemsize
    out_bytes = jnp.dtype(out_dtype).itemsize
    vmem_cap = _vmem_capacity_bytes()
    budget = int(0.6 * vmem_cap)
    footprint = functools.partial(
        _per_step_vmem_bytes, f_pad=F_pad, dout_pad=D_out_pad,
        mm_bytes=mm_bytes, out_bytes=out_bytes, w_bytes=w_bytes)

    N_pad = N
    t = _pick_node_tile(N, footprint, budget)
    if t is None:
        if N <= 2048 and footprint(N) <= budget:
            t = N                                # small / oddly-sized N: 1 tile
        else:
            N_pad = _round_up(N, _LANE)
            t = _pick_node_tile(N_pad, footprint, budget) or _LANE

    # v7x megacore: keep the "parallel" grid extent >= 2 when possible.
    if B * (N_pad // t) < 2:
        for smaller in (t // 2, t // 4):
            if smaller >= _LANE and smaller % _LANE == 0 and N_pad % smaller == 0:
                t = smaller
                break

    if N_pad != N:
        x = jnp.pad(x, ((0, 0), (0, N_pad - N), (0, 0)))
        a = jnp.pad(a, ((0, 0), (0, N_pad - N), (0, N_pad - N)))
        deg_inv_sqrt = jnp.pad(deg_inv_sqrt, ((0, 0), (0, N_pad - N), (0, 0)))

    n_t = N_pad // t

    # ---- A-tile layout / contraction form.
    if assume_symmetric_adjacency:
        a_index_map = lambda b, q, k: (b, q, k)     # plain (q,k) tile, dim-1 contract
        contract_dim = 1
    else:
        a_index_map = lambda b, q, k: (b, k, q)     # A[k-rows, q-cols], dim-0 contract
        contract_dim = 0

    in_specs = [
        pl.BlockSpec((None, t, F_pad), lambda b, q, k: (b, k, 0)),   # X (k rows)
        pl.BlockSpec((None, t, t), a_index_map),                     # A tile
    ]
    operands = [x, a]
    if aggregate_first:
        in_specs.append(pl.BlockSpec((F_pad, D_out_pad), lambda b, q, k: (0, 0)))
        operands.append(w)
        kernel = functools.partial(_gcn_agg_first_kernel,
                                   contract_dim=contract_dim)
    else:
        kernel = functools.partial(_gcn_transform_first_kernel,
                                   contract_dim=contract_dim)
    in_specs.append(pl.BlockSpec((None, t, 1), lambda b, q, k: (b, q, 0)))  # dq
    operands.append(deg_inv_sqrt)

    flops = 2 * B * N_pad * N_pad * F_pad
    if aggregate_first:
        flops += 2 * B * N_pad * F_pad * D_out_pad
    bytes_accessed = (B * N_pad * N_pad * mm_bytes
                      + B * n_t * N_pad * F_pad * mm_bytes
                      + B * N_pad * D_out_pad * out_bytes
                      + B * N_pad * 4 + w_bytes)
    vmem_limit = int(min(0.9 * vmem_cap,
                         max(32 * 1024 * 1024, 1.5 * footprint(t))))

    out = pl.pallas_call(
        kernel,
        out_shape=jax.ShapeDtypeStruct((B, N_pad, D_out_pad), out_dtype),
        grid_spec=pltpu.PrefetchScalarGridSpec(
            num_scalar_prefetch=0,
            grid=(B, n_t, n_t),     # (batch, output-row tile q, contraction k)
            in_specs=in_specs,
            out_specs=pl.BlockSpec((None, t, D_out_pad),
                                   lambda b, q, k: (b, q, 0)),
            scratch_shapes=[pltpu.VMEM((t, F_pad), jnp.float32)],
        ),
        compiler_params=pltpu.CompilerParams(
            dimension_semantics=("parallel", "parallel", "arbitrary"),
            vmem_limit_bytes=vmem_limit),
        cost_estimate=pl.CostEstimate(flops=flops, transcendentals=0,
                                      bytes_accessed=bytes_accessed),
    )(*operands)

    if N_pad != N or D_out_pad != D_out:
        out = out[:, :N, :D_out]
    return out


# --------------------------------------------------------------------------
# Reference + self-test
# --------------------------------------------------------------------------
def _reference(node_features, adjacency_matrix, weight):
    deg = jnp.sum(adjacency_matrix, axis=-1, keepdims=True)
    deg = jnp.maximum(deg, 1.0)
    d_inv_sqrt = deg ** -0.5
    norm_adj = d_inv_sqrt * adjacency_matrix * jnp.swapaxes(d_inv_sqrt, -2, -1)
    transformed = jnp.matmul(node_features, weight,
                             precision=jax.lax.Precision.HIGHEST)
    out = jnp.matmul(jnp.swapaxes(norm_adj, -2, -1), transformed,
                     precision=jax.lax.Precision.HIGHEST)
    return jnp.maximum(out, 0.0)


def _make_inputs(key, B, N, D_in, D_out):
    k_v, k_a, k_w = jax.random.split(key, 3)
    node_features = jax.random.normal(k_v, (B, N, D_in), dtype=jnp.float32)
    # Symmetric non-negative 0/1 adjacency with self loops (typical GCN input).
    a_raw = (jax.random.uniform(k_a, (B, N, N)) > 0.5).astype(jnp.float32)
    adjacency = jnp.clip(a_raw + jnp.swapaxes(a_raw, -2, -1) + jnp.eye(N),
                         0.0, 1.0)
    # reset_parameters(): U(-stdv, stdv), stdv = 1/sqrt(output_dim)
    stdv = 1.0 / math.sqrt(D_out)
    weight = jax.random.uniform(k_w, (D_in, D_out), minval=-stdv, maxval=stdv,
                                dtype=jnp.float32)
    return node_features, adjacency, weight


if __name__ == "__main__":
    key = jax.random.PRNGKey(0)
    k1, k2, k3 = jax.random.split(key, 3)

    # Case 1: small module-spec shape, aggregate-first path, f32 aggregation.
    v, a, w = _make_inputs(k1, B=2, N=16, D_in=8, D_out=32)
    out = jax.block_until_ready(
        graph_conv_layer(v, a, w, matmul_dtype=jnp.float32))
    ref = _reference(v, a, w)
    assert out.shape == ref.shape
    assert jnp.allclose(out, ref, atol=1e-5, rtol=1e-5), "case 1 mismatch"

    # Case 2: tiled N (384 -> single 384 tile), transform-first order
    # (D_out < D_in), f32 aggregation.
    v, a, w = _make_inputs(k2, B=2, N=384, D_in=64, D_out=32)
    out = jax.block_until_ready(
        graph_conv_layer(v, a, w, matmul_dtype=jnp.float32))
    ref = _reference(v, a, w)
    assert out.shape == ref.shape
    assert jnp.allclose(out, ref, atol=1e-4, rtol=1e-4), "case 2 mismatch"

    # Case 3: default bf16 aggregation (exact 0/1 adjacency) + symmetric-A
    # fast path; looser tolerance vs the f32 HIGHEST reference.
    v, a, w = _make_inputs(k3, B=2, N=384, D_in=64, D_out=32)
    out = jax.block_until_ready(
        graph_conv_layer(v, a, w, assume_symmetric_adjacency=True))
    ref = _reference(v, a, w)
    assert out.shape == ref.shape
    assert jnp.allclose(out, ref, atol=1e-2, rtol=1e-2), "case 3 mismatch"

    print("KERNEL_OK")
</pallas_src>

<mosaic_0001>
module attributes {stable_mosaic.version = 11 : i64} {
  func.func @_gcn_agg_first_kernel(%arg0: i32, %arg1: i32, %arg2: i32, %arg3: memref<1x16x128xf32, #tpu.memory_space<vmem>>, %arg4: memref<1x16x16xf32, #tpu.memory_space<vmem>>, %arg5: memref<128x128xf32, #tpu.memory_space<vmem>>, %arg6: memref<1x16x1xf32, #tpu.memory_space<vmem>>, %arg7: memref<1x16x128xf32, #tpu.memory_space<vmem>>, %arg8: memref<16x128xf32, #tpu.memory_space<vmem>>) attributes {dimension_semantics = [#tpu.dimension_semantics<parallel>, #tpu.dimension_semantics<parallel>, #tpu.dimension_semantics<arbitrary>], iteration_bounds = array<i64: 2, 1, 1>, scalar_prefetch = 0 : i64, scratch_operands = 1 : i64, tpu.core_type = #tpu.core_type<tc>, window_params = [{transform_indices = @transform_0, window_bounds = array<i64: 1, 16, 128>}, {transform_indices = @transform_1, window_bounds = array<i64: 1, 16, 16>}, {pipeline_mode = #tpu.pipeline_mode<synchronous>, transform_indices = @transform_2, window_bounds = array<i64: 128, 128>}, {transform_indices = @transform_3, window_bounds = array<i64: 1, 16, 1>}, {transform_indices = @transform_4, window_bounds = array<i64: 1, 16, 128>}]} {
    %c0_i32 = arith.constant 0 : i32
    %0 = arith.cmpi eq, %arg2, %c0_i32 : i32
    %1 = arith.extui %0 : i1 to i32
    %c0_i32_0 = arith.constant 0 : i32
    %2 = arith.cmpi ne, %1, %c0_i32_0 : i32
    scf.if %2 {
      %cst_12 = arith.constant 0.000000e+00 : f32
      %14 = vector.broadcast %cst_12 : f32 to vector<16x128xf32>
      %c0_13 = arith.constant 0 : index
      %c0_14 = arith.constant 0 : index
      %15 = vector.load %arg8[%c0_13, %c0_14] : memref<16x128xf32, #tpu.memory_space<vmem>>, vector<16x128xf32>
      tpu.vector_store %arg8[%c0_13, %c0_14], %14 {strides = array<i32>} : memref<16x128xf32, #tpu.memory_space<vmem>>, vector<16x128xf32>,
    } else {
    }
    %c0 = arith.constant 0 : index
    %c0_1 = arith.constant 0 : index
    %3 = vector.load %arg8[%c0, %c0_1] : memref<16x128xf32, #tpu.memory_space<vmem>>, vector<16x128xf32>
    %c0_2 = arith.constant 0 : index
    %c0_3 = arith.constant 0 : index
    %c0_4 = arith.constant 0 : index
    %4 = vector.load %arg4[%c0_2, %c0_3, %c0_4] : memref<1x16x16xf32, #tpu.memory_space<vmem>>, vector<1x16x16xf32>
    %5 = vector.shape_cast %4 : vector<1x16x16xf32> to vector<16x16xf32>
    %c0_5 = arith.constant 0 : index
    %c0_6 = arith.constant 0 : index
    %c0_7 = arith.constant 0 : index
    %6 = vector.load %arg3[%c0_5, %c0_6, %c0_7] : memref<1x16x128xf32, #tpu.memory_space<vmem>>, vector<1x16x128xf32>
    %7 = vector.shape_cast %6 : vector<1x16x128xf32> to vector<16x128xf32>
    %cst = arith.constant dense<0.000000e+00> : vector<16x128xf32>
    %8 = tpu.matmul %5, %7, %cst {dimension_numbers = #tpu.dot_dimension_numbers<[0], [0], [1], [1], [0, 1, 1, 1], [], []>} : vector<16x16xf32>, vector<16x128xf32>, vector<16x128xf32> -> vector<16x128xf32>
    %9 = arith.addf %3, %8 : vector<16x128xf32>
    %c0_8 = arith.constant 0 : index
    %c0_9 = arith.constant 0 : index
    %10 = vector.load %arg8[%c0_8, %c0_9] : memref<16x128xf32, #tpu.memory_space<vmem>>, vector<16x128xf32>
    tpu.vector_store %arg8[%c0_8, %c0_9], %9 {strides = array<i32>} : memref<16x128xf32, #tpu.memory_space<vmem>>, vector<16x128xf32>,
    %c0_i32_10 = arith.constant 0 : i32
    %11 = arith.cmpi eq, %arg2, %c0_i32_10 : i32
    %12 = arith.extui %11 : i1 to i32
    %c0_i32_11 = arith.constant 0 : i32
    %13 = arith.cmpi ne, %12, %c0_i32_11 : i32
    scf.if %13 {
      %c0_12 = arith.constant 0 : index
      %c0_13 = arith.constant 0 : index
      %14 = vector.load %arg8[%c0_12, %c0_13] : memref<16x128xf32, #tpu.memory_space<vmem>>, vector<16x128xf32>
      %c0_14 = arith.constant 0 : index
      %c0_15 = arith.constant 0 : index
      %15 = vector.load %arg5[%c0_14, %c0_15] : memref<128x128xf32, #tpu.memory_space<vmem>>, vector<128x128xf32>
      %cst_16 = arith.constant dense<0.000000e+00> : vector<16x128xf32>
      %16 = tpu.matmul %14, %15, %cst_16 {dimension_numbers = #tpu.dot_dimension_numbers<[1], [0], [0], [1], [0, 0, 1, 1], [], []>} : vector<16x128xf32>, vector<128x128xf32>, vector<16x128xf32> -> vector<16x128xf32>
      %c0_17 = arith.constant 0 : index
      %c0_18 = arith.constant 0 : index
      %c0_19 = arith.constant 0 : index
      %17 = vector.load %arg6[%c0_17, %c0_18, %c0_19] : memref<1x16x1xf32, #tpu.memory_space<vmem>>, vector<1x16x1xf32>
      %18 = vector.shape_cast %17 : vector<1x16x1xf32> to vector<16x1xf32>
      %19 = vector.broadcast %18 : vector<16x1xf32> to vector<16x128xf32>
      %20 = arith.mulf %16, %19 : vector<16x128xf32>
      %cst_20 = arith.constant 0.000000e+00 : f32
      %21 = vector.broadcast %cst_20 : f32 to vector<16x128xf32>
      %22 = arith.maximumf %20, %21 : vector<16x128xf32>
      %c0_21 = arith.constant 0 : index
      %c0_22 = arith.constant 0 : index
      %c0_23 = arith.constant 0 : index
      %23 = vector.load %arg7[%c0_21, %c0_22, %c0_23] : memref<1x16x128xf32, #tpu.memory_space<vmem>>, vector<1x16x128xf32>
      %24 = vector.shape_cast %23 : vector<1x16x128xf32> to vector<16x128xf32>
      %25 = vector.shape_cast %22 : vector<16x128xf32> to vector<1x16x128xf32>
      tpu.vector_store %arg7[%c0_21, %c0_22, %c0_23], %25 {strides = array<i32>} : memref<1x16x128xf32, #tpu.memory_space<vmem>>, vector<1x16x128xf32>,
    } else {
    }
    return
  }
  func.func @transform_0(%arg0: i32, %arg1: i32, %arg2: i32) -> (i32, i32, i32) {
    %c0_i32 = arith.constant 0 : i32
    %c0_i32_0 = arith.constant 0 : i32
    return %arg0, %arg2, %c0_i32 : i32, i32, i32
  }
  func.func @transform_1(%arg0: i32, %arg1: i32, %arg2: i32) -> (i32, i32, i32) {
    %c0_i32 = arith.constant 0 : i32
    return %arg0, %arg2, %arg1 : i32, i32, i32
  }
  func.func @transform_2(%arg0: i32, %arg1: i32, %arg2: i32) -> (i32, i32) {
    %c0_i32 = arith.constant 0 : i32
    %c0_i32_0 = arith.constant 0 : i32
    %c0_i32_1 = arith.constant 0 : i32
    return %c0_i32, %c0_i32_0 : i32, i32
  }
  func.func @transform_3(%arg0: i32, %arg1: i32, %arg2: i32) -> (i32, i32, i32) {
    %c0_i32 = arith.constant 0 : i32
    %c0_i32_0 = arith.constant 0 : i32
    return %arg0, %arg1, %c0_i32 : i32, i32, i32
  }
  func.func @transform_4(%arg0: i32, %arg1: i32, %arg2: i32) -> (i32, i32, i32) {
    %c0_i32 = arith.constant 0 : i32
    %c0_i32_0 = arith.constant 0 : i32
    return %arg0, %arg1, %c0_i32 : i32, i32, i32
  }
}

</mosaic_0001>

<llo_original>
// kernel: tpu_custom_call.1
$region0: #{tpu_custom_call.1}
  #allocation0 [shape = 'u32[]', space=smem, size = 0x4, offset = 0x4, fixed_abs, tag = 'smem constant byte address 0x4 - core index']
  #allocation1 [shape = 'u32[144,128]{1,0:T(1,128)}', space=vmem, size = 0x12000, scoped, tag = 'internal scratch']
  #allocation2 [shape = 'f32[16,128]{1,0:T(8,128)}', space=vmem, size = 0x2000, scoped, tag = 'scratch operand']
  %s0 = inlined_call_operand.vmem [shape: f32[2,16,128], index: 0, kind: input, shape index: {}]
  %s1 = inlined_call_operand.hbm [shape: f32[2,16,16], index: 1, kind: input, shape index: {}]
  %s2 = inlined_call_operand.hbm [shape: f32[128,128], index: 2, kind: input, shape index: {}]
  %s3 = inlined_call_operand.vmem [shape: f32[2,16,1], index: 3, kind: input, shape index: {}]
  %s4 = inlined_call_operand.hbm [shape: f32[2,16,128], index: 4, kind: output, shape index: {}]
  %s5 = sld [smem:[#allocation0]]
  $region65: #{tpu_custom_call.1} parent=0
    _
  %s7 = ssub.s32 1, %s5
  %s8 = scalar_select 0, %s7, %s5
  $region1: #{tpu_custom_call.1} parent=0
    #allocation3 [shape = 'u8[16384]{0}', space=vmem, size = 0x4000, scoped, tag = 'input window, operand 1']
    #allocation4 [shape = 's32[2]{0}', space=sflag, size = 0x8, scoped, tag = 'scoped memory for tpu_custom_call.1']
    #allocation5 [shape = 's32[2]{0}', space=sflag, size = 0x8, scoped, tag = 'scoped memory for tpu_custom_call.1']
    #allocation6 [shape = 'u8[65536]{0}', space=vmem, size = 0x10000, scoped, tag = 'input window, operand 2, single buffered']
    #allocation7 [shape = 's32[1]{0}', space=sflag, size = 0x4, scoped, tag = 'scoped memory for tpu_custom_call.1']
    #allocation8 [shape = 'u8[16384]{0}', space=vmem, size = 0x4000, scoped, tag = 'output window, operand 0']
    %9 = vsyncpa [#allocation4], 0
    %s10 = scalar_lea.sflag [#allocation4], 1
    %11 = vsyncpa %s10, 0
    %12 = vsyncpa [#allocation7], 0
    %13 = vsyncpa [#allocation5], 0
    %s14 = scalar_lea.sflag [#allocation5], 1
    %15 = vsyncpa %s14, 0
    loop: start=0, step=1, limit=4
    $region2: #{tpu_custom_call.1} parent=1 // loop_pre_header
      _
    $region3: #{tpu_custom_call.1} parent=1 // loop_header
      %s17 = sphi 0, %s21
      %p18 = scmp.ge.s32.totalorder %s17, 4
      %s24 = sphi 0, %s43
      %s25 = sphi 0, %s39
      %s26 = sphi 0, %s35
      %s27 = sphi 0, %s24
      %s28 = sphi 0, %s25
      %s29 = sphi 0, %s26
      %s30 = sphi 0, %s27
      %s31 = sphi 0, %s28
      %s32 = sphi 0, %s29
      %s48 = sphi 0, %s50
      %s51 = sphi 0, %s48
      %s52 = sphi 0, %s51
      %s68 = sphi 0, %s52
      %s78 = sphi 0, %s80
      %s81 = sphi 0, %s78
      %s82 = sphi 0, %s81
      %s98 = sphi 0, %s82
      %s102 = sphi 0, %s102
      %s104 = sphi 0, %s102
      %s105 = sphi 0, %s104
      %s119 = sphi 0, %s105
      %s127 = sphi 0, %s129
      %s130 = sphi 0, %s127
      %s131 = sphi 0, %s130
      %s147 = sphi 0, %s131
      %s155 = sphi 0, %s157
      %s158 = sphi 0, %s155
      %s159 = sphi 0, %s158
      %s175 = sphi 0, %s159
    $region4: #{tpu_custom_call.1} parent=1 // loop_header_branch
      %20 = sbr.rel (%p18) target = $region8
    $region5: #{tpu_custom_call.1} parent=1 // loop_body
      %s22 = ssub.s32 %s17, 1
      %s23 = ssub.s32 %s17, 2
      %s33 = sadd.s32 1, %s26
      %p34 = scmp.ge.s32.totalorder %s33, 1
      %s35 = scalar_select %p34, 0, %s33
      %s36 = sadd.s32 1, %s25
      %s37 = scalar_select %p34, %s36, %s25
      %p38 = scmp.ge.s32.totalorder %s37, 1
      %s39 = scalar_select %p38, 0, %s37
      %s40 = sadd.s32 1, %s24
      %s41 = scalar_select %p38, %s40, %s24
      %p42 = scmp.ge.s32.totalorder %s41, 2
      %s43 = scalar_select %p42, 0, %s41
      %s44 = ssub.s32 %s24, %s43
      %s45 = ssub.s32 %s26, %s35
      %s46 = sor.u32 %s44, %s45
      %p47 = scmp.eq.s32.totalorder %s46, 0
      %s49 = sadd.s32 %s48, 1
      %s50 = scalar_select %p47, %s48, %s49
      %p53 = pneg %p47
      %p54 = scmp.eq.s32.totalorder %s17, 1
      %p55 = por %p53, %p54
      %p56 = scmp.ne.s32.totalorder %s48, %s51
      %p57 = scmp.eq.s32.totalorder %s17, 0
      %p58 = por %p56, %p57
      %p59 = scmp.ne.s32.totalorder %s48, %s51
      %p60 = scmp.eq.s32.totalorder %s22, 1
      %p61 = por %p59, %p60
      %p62 = scmp.ne.s32.totalorder %s51, %s52
      %p63 = scmp.eq.s32.totalorder %s22, 0
      %p64 = por %p62, %p63
      %p65 = scmp.ne.s32.totalorder %s51, %s52
      %p66 = scmp.eq.s32.totalorder %s23, 1
      %p67 = por %p65, %p66
      %p69 = scmp.ne.s32.totalorder %s52, %s68
      %p70 = scmp.eq.s32.totalorder %s23, 0
      %p71 = por %p69, %p70
      %s72 = ssub.s32 %s24, %s43
      %s73 = ssub.s32 %s26, %s35
      %s74 = sor.u32 %s72, %s73
      %s75 = ssub.s32 %s25, %s39
      %s76 = sor.u32 %s74, %s75
      %p77 = scmp.eq.s32.totalorder %s76, 0
      %s79 = sadd.s32 %s78, 1
      %s80 = scalar_select %p77, %s78, %s79
      %p83 = pneg %p77
      %p84 = scmp.eq.s32.totalorder %s17, 1
      %p85 = por %p83, %p84
      %p86 = scmp.ne.s32.totalorder %s78, %s81
      %p87 = scmp.eq.s32.totalorder %s17, 0
      %p88 = por %p86, %p87
      %p89 = scmp.ne.s32.totalorder %s78, %s81
      %p90 = scmp.eq.s32.totalorder %s22, 1
      %p91 = por %p89, %p90
      %p92 = scmp.ne.s32.totalorder %s81, %s82
      %p93 = scmp.eq.s32.totalorder %s22, 0
      %p94 = por %p92, %p93
      %p95 = scmp.ne.s32.totalorder %s81, %s82
      %p96 = scmp.eq.s32.totalorder %s23, 1
      %p97 = por %p95, %p96
      %p99 = scmp.ne.s32.totalorder %s82, %s98
      %p100 = scmp.eq.s32.totalorder %s23, 0
      %p101 = por %p99, %p100
      %s103 = sadd.s32 %s102, 1
      %p106 = scmp.eq.s32.totalorder %s17, 1
      %p107 = scmp.ne.s32.totalorder %s102, %s104
      %p108 = scmp.eq.s32.totalorder %s17, 0
      %p109 = por %p107, %p108
      %p110 = scmp.ne.s32.totalorder %s102, %s104
      %p111 = scmp.eq.s32.totalorder %s22, 1
      %p112 = por %p110, %p111
      %p113 = scmp.ne.s32.totalorder %s104, %s105
      %p114 = scmp.eq.s32.totalorder %s22, 0
      %p115 = por %p113, %p114
      %p116 = scmp.ne.s32.totalorder %s104, %s105
      %p117 = scmp.eq.s32.totalorder %s23, 1
      %p118 = por %p116, %p117
      %p120 = scmp.ne.s32.totalorder %s105, %s119
      %p121 = scmp.eq.s32.totalorder %s23, 0
      %p122 = por %p120, %p121
      %s123 = ssub.s32 %s24, %s43
      %s124 = ssub.s32 %s25, %s39
      %s125 = sor.u32 %s123, %s124
      %p126 = scmp.eq.s32.totalorder %s125, 0
      %s128 = sadd.s32 %s127, 1
      %s129 = scalar_select %p126, %s127, %s128
      %p132 = pneg %p126
      %p133 = scmp.eq.s32.totalorder %s17, 1
      %p134 = por %p132, %p133
      %p135 = scmp.ne.s32.totalorder %s127, %s130
      %p136 = scmp.eq.s32.totalorder %s17, 0
      %p137 = por %p135, %p136
      %p138 = scmp.ne.s32.totalorder %s127, %s130
      %p139 = scmp.eq.s32.totalorder %s22, 1
      %p140 = por %p138, %p139
      %p141 = scmp.ne.s32.totalorder %s130, %s131
      %p142 = scmp.eq.s32.totalorder %s22, 0
      %p143 = por %p141, %p142
      %p144 = scmp.ne.s32.totalorder %s130, %s131
      %p145 = scmp.eq.s32.totalorder %s23, 1
      %p146 = por %p144, %p145
      %p148 = scmp.ne.s32.totalorder %s131, %s147
      %p149 = scmp.eq.s32.totalorder %s23, 0
      %p150 = por %p148, %p149
      %s151 = ssub.s32 %s24, %s43
      %s152 = ssub.s32 %s25, %s39
      %s153 = sor.u32 %s151, %s152
      %p154 = scmp.eq.s32.totalorder %s153, 0
      %s156 = sadd.s32 %s155, 1
      %s157 = scalar_select %p154, %s155, %s156
      %p160 = pneg %p154
      %p161 = scmp.eq.s32.totalorder %s17, 1
      %p162 = por %p160, %p161
      %p163 = scmp.ne.s32.totalorder %s155, %s158
      %p164 = scmp.eq.s32.totalorder %s17, 0
      %p165 = por %p163, %p164
      %p166 = scmp.ne.s32.totalorder %s155, %s158
      %p167 = scmp.eq.s32.totalorder %s22, 1
      %p168 = por %p166, %p167
      %p169 = scmp.ne.s32.totalorder %s158, %s159
      %p170 = scmp.eq.s32.totalorder %s22, 0
      %p171 = por %p169, %p170
      %p172 = scmp.ne.s32.totalorder %s158, %s159
      %p173 = scmp.eq.s32.totalorder %s23, 1
      %p174 = por %p172, %p173
      %p176 = scmp.ne.s32.totalorder %s159, %s175
      %p177 = scmp.eq.s32.totalorder %s23, 0
      %p178 = por %p176, %p177
      %p179 = scmp.le.s32.totalorder 1, %s17
      %p180 = scmp.lt.s32.totalorder %s17, 3
      %p181 = pnand %p179, %p180
      %p182 = pneg %p181
      // Predicated region
      $region9: #{tpu_custom_call.1} parent=5 // pred_check
        _
      $region10: #{tpu_custom_call.1} parent=5 // pred_check_branch
        %184 = sbr.rel (%p181) target = $region12
      $region11: #{tpu_custom_call.1} parent=5 // pred_region
        %s185 = ssub.s32 %s17, 1
        // Predicated region
        $region13: #{tpu_custom_call.1} parent=11 // pred_check
          %p186 = pneg %p115
        $region14: #{tpu_custom_call.1} parent=11 // pred_check_branch
          %188 = sbr.rel (%p186) target = $region16
        $region15: #{tpu_custom_call.1} parent=11 // pred_region
          %s190 = ssub.s32 2048, 2048
          %191 = vsyncadd [#allocation7], %s190
          %s192 = sshll.u32 [#allocation6], 4
          %s193 = int_to_ptr.vmem [resolvable:$true] %s192
          %198 = dma.hbm_to_vmem [thread:$0]  %s2, 2048, %s193, [#allocation7], 128, 128, 8
        $region16: #{tpu_custom_call.1} parent=11 // pred_fallthru
          _
      $region12: #{tpu_custom_call.1} parent=5 // pred_fallthru
        _
      %p199 = scmp.lt.s32.totalorder %s17, 2
      // Predicated region
      $region17: #{tpu_custom_call.1} parent=5 // pred_check
        %p200 = pneg %p199
      $region18: #{tpu_custom_call.1} parent=5 // pred_check_branch
        %202 = sbr.rel (%p200) target = $region20
      $region19: #{tpu_custom_call.1} parent=5 // pred_region
        // Predicated region
        $region21: #{tpu_custom_call.1} parent=19 // pred_check
          %p203 = pneg %p58
        $region22: #{tpu_custom_call.1} parent=19 // pred_check_branch
          %205 = sbr.rel (%p203) target = $region24
        $region23: #{tpu_custom_call.1} parent=19 // pred_region
          %s206 = smul.u32 2, %s26
          %p207 = scmp.lt.s32.totalorder %s24, 1
          %s208 = scalar_select %p207, %s24, 1
          %p209 = scmp.lt.s32.totalorder %s206, 1
          %s210 = scalar_select %p209, %s206, 1
          %s211 = smul.addr %s208, 2
          %s212 = sadd.s32 %s210, %s211
          %s213 = smul.addr %s212, 8
          %s214 = scalar_lea.vmem %s0, %s213
          %s215 = smul.u32 2, %s26
        $region24: #{tpu_custom_call.1} parent=19 // pred_fallthru
          _
        // Predicated region
        $region25: #{tpu_custom_call.1} parent=19 // pred_check
          %p216 = pneg %p88
        $region26: #{tpu_custom_call.1} parent=19 // pred_check_branch
          %218 = sbr.rel (%p216) target = $region28
        $region27: #{tpu_custom_call.1} parent=19 // pred_region
          %s219 = sand.u32 %s78, 1
          %s220 = scalar_lea.sflag [#allocation4], %s219
          %s221 = sand.u32 %s78, 1
          %s222 = smul.addr %s221, 16
          %s223 = scalar_lea.vmem [#allocation3], %s222
          %s224 = smul.u32 2, %s26
          %s226 = ssub.s32 256, 256
          %227 = vsyncadd %s220, %s226
          %s228 = sadd.s32 %s25, %s224
          %s229 = smul.addr %s24, 2
          %s230 = sadd.s32 %s228, %s229
          %s231 = smul.addr %s230, 128
          %s232 = scalar_lea.hbm %s1, %s231
          %s233 = sshll.u32 %s223, 4
          %s234 = int_to_ptr.vmem [resolvable:$true] %s233
          %239 = dma.hbm_to_vmem [thread:$0]  %s232, 256, %s234, %s220, 128, 128, 8
        $region28: #{tpu_custom_call.1} parent=19 // pred_fallthru
          _
        // Predicated region
        $region29: #{tpu_custom_call.1} parent=19 // pred_check
          %p240 = pneg %p137
        $region30: #{tpu_custom_call.1} parent=19 // pred_check_branch
          %242 = sbr.rel (%p240) target = $region32
        $region31: #{tpu_custom_call.1} parent=19 // pred_region
          %s243 = smul.u32 2, %s25
          %p244 = scmp.lt.s32.totalorder %s24, 1
          %s245 = scalar_select %p244, %s24, 1
          %p246 = scmp.lt.s32.totalorder %s243, 1
          %s247 = scalar_select %p246, %s243, 1
          %s248 = smul.addr %s245, 2
          %s249 = sadd.s32 %s247, %s248
          %s250 = smul.addr %s249, 8
          %s251 = scalar_lea.vmem %s3, %s250
          %s252 = smul.u32 2, %s25
        $region32: #{tpu_custom_call.1} parent=19 // pred_fallthru
          _
      $region20: #{tpu_custom_call.1} parent=5 // pred_fallthru
        _
      %p253 = scmp.le.s32.totalorder 1, %s17
      %p254 = scmp.lt.s32.totalorder %s17, 3
      %p255 = pnand %p253, %p254
      %p256 = pneg %p255
      // Predicated region
      $region33: #{tpu_custom_call.1} parent=5 // pred_check
        _
      $region34: #{tpu_custom_call.1} parent=5 // pred_check_branch
        %258 = sbr.rel (%p255) target = $region36
      $region35: #{tpu_custom_call.1} parent=5 // pred_region
        %s259 = ssub.s32 %s17, 1
        %s260 = sand.u32 %s81, 1
        %s261 = scalar_lea.sflag [#allocation4], %s260
        %s262 = sand.u32 %s81, 1
        %s263 = smul.addr %s262, 16
        %s264 = scalar_lea.vmem [#allocation3], %s263
        // Predicated region
        $region37: #{tpu_custom_call.1} parent=35 // pred_check
          %p265 = pneg %p94
        $region38: #{tpu_custom_call.1} parent=35 // pred_check_branch
          %267 = sbr.rel (%p265) target = $region40
        $region39: #{tpu_custom_call.1} parent=35 // pred_region
          %268 = dma.done %s261, 256
        $region40: #{tpu_custom_call.1} parent=35 // pred_fallthru
          _
        // Predicated region
        $region41: #{tpu_custom_call.1} parent=35 // pred_check
          %p269 = pneg %p115
        $region42: #{tpu_custom_call.1} parent=35 // pred_check_branch
          %271 = sbr.rel (%p269) target = $region44
        $region43: #{tpu_custom_call.1} parent=35 // pred_region
          %272 = dma.done [#allocation7], 2048
        $region44: #{tpu_custom_call.1} parent=35 // pred_fallthru
          _
        %s273 = smul.u32 2, %s29
        %p274 = scmp.lt.s32.totalorder %s27, 1
        %s275 = scalar_select %p274, %s27, 1
        %p276 = scmp.lt.s32.totalorder %s273, 1
        %s277 = scalar_select %p276, %s273, 1
        %s278 = smul.addr %s275, 2
        %s279 = sadd.s32 %s277, %s278
        %s280 = smul.addr %s279, 8
        %s281 = scalar_lea.vmem %s0, %s280
        %p282 = pneg %p64
        %p283 = pneg %p61
        %s284 = sand.u32 %s81, 1
        %s285 = scalar_lea.sflag [#allocation4], %s284
        %s286 = sand.u32 %s81, 1
        %s287 = smul.addr %s286, 16
        %s288 = scalar_lea.vmem [#allocation3], %s287
        %p289 = pneg %p94
        %p290 = pneg %p91
        %p291 = pneg %p115
        %p292 = pneg %p112
        %s293 = smul.u32 2, %s28
        %p294 = scmp.lt.s32.totalorder %s27, 1
        %s295 = scalar_select %p294, %s27, 1
        %p296 = scmp.lt.s32.totalorder %s293, 1
        %s297 = scalar_select %p296, %s293, 1
        %s298 = smul.addr %s295, 2
        %s299 = sadd.s32 %s297, %s298
        %s300 = smul.addr %s299, 8
        %s301 = scalar_lea.vmem %s3, %s300
        %p302 = pneg %p143
        %p303 = pneg %p140
        %p304 = pneg %p171
        %p305 = pneg %p168
        %s306 = sand.u32 %s158, 1
        %s307 = scalar_lea.sflag [#allocation5], %s306
        %s308 = sand.u32 %s158, 1
        %s309 = smul.addr %s308, 16
        %s310 = scalar_lea.vmem [#allocation8], %s309
        %s311 = smul.u32 2, %s29
        %p312 = scmp.lt.s32.totalorder %s27, 1
        %s313 = scalar_select %p312, %s27, 1
        %p314 = scmp.lt.s32.totalorder %s311, 1
        %s315 = scalar_select %p314, %s311, 1
        %s316 = smul.addr %s313, 2
        %s317 = sadd.s32 %s315, %s316
        %s318 = smul.addr %s317, 8
        %s319 = scalar_lea.vmem %s0, %s318
        %s320 = smul.u32 2, %s29
        %s321 = smul.u32 2, %s29
        %s322 = smul.u32 2, %s28
        %p323 = scmp.lt.s32.totalorder %s27, 1
        %s324 = scalar_select %p323, %s27, 1
        %p325 = scmp.lt.s32.totalorder %s322, 1
        %s326 = scalar_select %p325, %s322, 1
        %s327 = smul.addr %s324, 2
        %s328 = sadd.s32 %s326, %s327
        %s329 = smul.addr %s328, 8
        %s330 = scalar_lea.vmem %s3, %s329
        %s331 = smul.u32 2, %s28
        %s332 = smul.u32 2, %s28
        %p333 = scmp.eq.s32.totalorder %s29, 0
        // Predicated region
        $region45: #{tpu_custom_call.1} parent=35 // pred_check
          %p334 = pneg %p333
        $region46: #{tpu_custom_call.1} parent=35 // pred_check_branch
          %336 = sbr.rel (%p334) target = $region48
        $region47: #{tpu_custom_call.1} parent=35 // pred_region
          %337 = vst [vmem:[#allocation2] sm:$0xff] 0.0
          %338 = vst [vmem:[#allocation2 + $0x8] sm:$0xff] 0.0
        $region48: #{tpu_custom_call.1} parent=35 // pred_fallthru
          _
        %v339 = vld [vmem:[#allocation2] sm:$0xff]
        %v340 = vld [vmem:[#allocation2 + $0x8] sm:$0xff]
        %v341 = vld [vmem:[%s264] sm:$0xff]
        %v342 = vld [vmem:[%s264 + $0x8] sm:$0xff]
        %v343 = vld [vmem:[%s319] sm:$0xff]
        %v344 = vld [vmem:[%s319 + $0x8] sm:$0xff]
        %345 = vxpose.xlu0.b32.start [1/16] %v341, 128
        %346 = vxpose.xlu0.b32.cont [2/16] %v342, 128
        %347 = vxpose.xlu0.b32.cont [3/16] 0.0, 128
        %348 = vxpose.xlu0.b32.cont [4/16] 0.0, 128
        %349 = vxpose.xlu0.b32.cont [5/16] 0.0, 128
        %350 = vxpose.xlu0.b32.cont [6/16] 0.0, 128
        %351 = vxpose.xlu0.b32.cont [7/16] 0.0, 128
        %352 = vxpose.xlu0.b32.cont [8/16] 0.0, 128
        %353 = vxpose.xlu0.b32.cont [9/16] 0.0, 128
        %354 = vxpose.xlu0.b32.cont [10/16] 0.0, 128
        %355 = vxpose.xlu0.b32.cont [11/16] 0.0, 128
        %356 = vxpose.xlu0.b32.cont [12/16] 0.0, 128
        %357 = vxpose.xlu0.b32.cont [13/16] 0.0, 128
        %358 = vxpose.xlu0.b32.cont [14/16] 0.0, 128
        %359 = vxpose.xlu0.b32.cont [15/16] 0.0, 128
        %360 = vxpose.xlu0.b32.end [16/16] 0.0, 128
        %v361 = vpop.trf.xlu0
        %v362 = vpop.trf.xlu0
        %v363 = vpop.trf.xlu0
        %v364 = vpop.trf.xlu0
        %v365 = vpop.trf.xlu0
        %v366 = vpop.trf.xlu0
        %v367 = vpop.trf.xlu0
        %v368 = vpop.trf.xlu0
        %v369 = vpop.trf.xlu0
        %v370 = vpop.trf.xlu0
        %v371 = vpop.trf.xlu0
        %v372 = vpop.trf.xlu0
        %v373 = vpop.trf.xlu0
        %v374 = vpop.trf.xlu0
        %v375 = vpop.trf.xlu0
        %v376 = vpop.trf.xlu0
        %vm377 = vcmask 130048
        %v379 = vsel %vm377, %v361, 0
        %v382 = vsel %vm377, %v362, 0
        %384 = vmatprep.subr.mxu0 0.0
        %385 = vmatpush1.msra.mxu0 0.0
        %386 = vmatprep.subr.mxu0 0.0
        %387 = vmatpush1.msra.mxu0 0.0
        %388 = vmatprep.subr.mxu0 0.0
        %389 = vmatpush1.msra.mxu0 0.0
        %390 = vmatprep.subr.mxu0 0.0
        %391 = vmatpush1.msra.mxu0 0.0
        %392 = vmatprep.subr.mxu0 0.0
        %393 = vmatpush1.msra.mxu0 0.0
        %394 = vmatprep.subr.mxu0 0.0
        %395 = vmatpush1.msra.mxu0 0.0
        %396 = vmatprep.subr.mxu0 0.0
        %397 = vmatpush1.msra.mxu0 0.0
        %398 = vmatprep.subr.mxu0 0.0
        %399 = vmatpush1.msra.mxu0 0.0
        %400 = vmatprep.subr.mxu0 0.0
        %401 = vmatpush1.msra.mxu0 0.0
        %402 = vmatprep.subr.mxu0 0.0
        %403 = vmatpush1.msra.mxu0 0.0
        %404 = vmatprep.subr.mxu0 0.0
        %405 = vmatpush1.msra.mxu0 0.0
        %406 = vmatprep.subr.mxu0 0.0
        %407 = vmatpush1.msra.mxu0 0.0
        %408 = vmatprep.subr.mxu0 0.0
        %409 = vmatpush1.msra.mxu0 0.0
        %410 = vmatprep.subr.mxu0 0.0
        %411 = vmatpush1.msra.mxu0 0.0
        %412 = vmatprep.subr.mxu0 0.0
        %413 = vmatpush1.msra.mxu0 %v344
        %414 = vmatprep.subr.mxu0 0.0
        %415 = vmatpush1.msra.mxu0 %v343
        %416 = vmatprep.subr.mxu0 0.0
        %417 = vmatpush2.msra.mxu0 0.0
        %418 = vmatprep.subr.mxu0 0.0
        %419 = vmatpush2.msra.mxu0 0.0
        %420 = vmatprep.subr.mxu0 0.0
        %421 = vmatpush2.msra.mxu0 0.0
        %422 = vmatprep.subr.mxu0 0.0
        %423 = vmatpush2.msra.mxu0 0.0
        %424 = vmatprep.subr.mxu0 0.0
        %425 = vmatpush2.msra.mxu0 0.0
        %426 = vmatprep.subr.mxu0 0.0
        %427 = vmatpush2.msra.mxu0 0.0
        %428 = vmatprep.subr.mxu0 0.0
        %429 = vmatpush2.msra.mxu0 0.0
        %430 = vmatprep.subr.mxu0 0.0
        %431 = vmatpush2.msra.mxu0 0.0
        %432 = vmatprep.subr.mxu0 0.0
        %433 = vmatpush2.msra.mxu0 0.0
        %434 = vmatprep.subr.mxu0 0.0
        %435 = vmatpush2.msra.mxu0 0.0
        %436 = vmatprep.subr.mxu0 0.0
        %437 = vmatpush2.msra.mxu0 0.0
        %438 = vmatprep.subr.mxu0 0.0
        %439 = vmatpush2.msra.mxu0 0.0
        %440 = vmatprep.subr.mxu0 0.0
        %441 = vmatpush2.msra.mxu0 0.0
        %442 = vmatprep.subr.mxu0 0.0
        %443 = vmatpush2.msra.mxu0 0.0
        %444 = vmatprep.subr.mxu0 0.0
        %445 = vmatpush2.msra.mxu0 0.0
        %446 = vmatprep.subr.mxu0 0.0
        %447 = vmatpush2.msra.mxu0 0.0
        %448 = vmatprep.mubr.f32.mxu0 0.0
        %449 = vmatmul.mubr.f32.gmra.mxu0 %v379
        %v450 = vpop.f32.mrf.mxu0
        %v451 = vadd.f32 0.0, %v450
        %v452 = vpop.f32.mrf.mxu0
        %453 = vmatprep.mubr.f32.mxu0 0.0
        %454 = vmatmul.mubr.f32.gmra.mxu0 %v382
        %v455 = vpop.f32.mrf.mxu0
        %v456 = vadd.f32 0.0, %v455
        %v457 = vpop.f32.mrf.mxu0
        %458 = vdwg.mxu0
        %v459 = vadd.f32 %v339, %v451
        %v460 = vadd.f32 %v340, %v456
        %461 = vst [vmem:[#allocation2] sm:$0xff] %v459
        %462 = vst [vmem:[#allocation2 + $0x8] sm:$0xff] %v460
        // Predicated region
        $region49: #{tpu_custom_call.1} parent=35 // pred_check
          %p463 = pneg %p333
        $region50: #{tpu_custom_call.1} parent=35 // pred_check_branch
          %465 = sbr.rel (%p463) target = $region52
        $region51: #{tpu_custom_call.1} parent=35 // pred_region
          %v466 = vld [vmem:[#allocation2] sm:$0xff]
          %v467 = vld [vmem:[#allocation2 + $0x8] sm:$0xff]
          %v468 = vld [vmem:[#allocation6] sm:$0xff]
          %v469 = vld [vmem:[#allocation6 + $0x8] sm:$0xff]
          %v470 = vld [vmem:[#allocation6 + $0x10] sm:$0xff]
          %v471 = vld [vmem:[#allocation6 + $0x18] sm:$0xff]
          %v472 = vld [vmem:[#allocation6 + $0x20] sm:$0xff]
          %v473 = vld [vmem:[#allocation6 + $0x28] sm:$0xff]
          %v474 = vld [vmem:[#allocation6 + $0x30] sm:$0xff]
          %v475 = vld [vmem:[#allocation6 + $0x38] sm:$0xff]
          %v476 = vld [vmem:[#allocation6 + $0x40] sm:$0xff]
          %v477 = vld [vmem:[#allocation6 + $0x48] sm:$0xff]
          %v478 = vld [vmem:[#allocation6 + $0x50] sm:$0xff]
          %v479 = vld [vmem:[#allocation6 + $0x58] sm:$0xff]
          %v480 = vld [vmem:[#allocation6 + $0x60] sm:$0xff]
          %v481 = vld [vmem:[#allocation6 + $0x68] sm:$0xff]
          %v482 = vld [vmem:[#allocation6 + $0x70] sm:$0xff]
          %v483 = vld [vmem:[#allocation6 + $0x78] sm:$0xff]
          %484 = vmatprep.subr.mxu0 0.0
          %485 = vmatpush1.msra.mxu0 %v483
          %486 = vmatprep.subr.mxu0 0.0
          %487 = vmatpush1.msra.mxu0 %v482
          %488 = vmatprep.subr.mxu0 0.0
          %489 = vmatpush1.msra.mxu0 %v481
          %490 = vmatprep.subr.mxu0 0.0
          %491 = vmatpush1.msra.mxu0 %v480
          %492 = vmatprep.subr.mxu0 0.0
          %493 = vmatpush1.msra.mxu0 %v479
          %494 = vmatprep.subr.mxu0 0.0
          %495 = vmatpush1.msra.mxu0 %v478
          %496 = vmatprep.subr.mxu0 0.0
          %497 = vmatpush1.msra.mxu0 %v477
          %498 = vmatprep.subr.mxu0 0.0
          %499 = vmatpush1.msra.mxu0 %v476
          %500 = vmatprep.subr.mxu0 0.0
          %501 = vmatpush1.msra.mxu0 %v475
          %502 = vmatprep.subr.mxu0 0.0
          %503 = vmatpush1.msra.mxu0 %v474
          %504 = vmatprep.subr.mxu0 0.0
          %505 = vmatpush1.msra.mxu0 %v473
          %506 = vmatprep.subr.mxu0 0.0
          %507 = vmatpush1.msra.mxu0 %v472
          %508 = vmatprep.subr.mxu0 0.0
          %509 = vmatpush1.msra.mxu0 %v471
          %510 = vmatprep.subr.mxu0 0.0
          %511 = vmatpush1.msra.mxu0 %v470
          %512 = vmatprep.subr.mxu0 0.0
          %513 = vmatpush1.msra.mxu0 %v469
          %514 = vmatprep.subr.mxu0 0.0
          %515 = vmatpush1.msra.mxu0 %v468
          %516 = vmatprep.subr.mxu0 0.0
          %517 = vmatpush2.msra.mxu0 0.0
          %518 = vmatprep.subr.mxu0 0.0
          %519 = vmatpush2.msra.mxu0 0.0
          %520 = vmatprep.subr.mxu0 0.0
          %521 = vmatpush2.msra.mxu0 0.0
          %522 = vmatprep.subr.mxu0 0.0
          %523 = vmatpush2.msra.mxu0 0.0
          %524 = vmatprep.subr.mxu0 0.0
          %525 = vmatpush2.msra.mxu0 0.0
          %526 = vmatprep.subr.mxu0 0.0
          %527 = vmatpush2.msra.mxu0 0.0
          %528 = vmatprep.subr.mxu0 0.0
          %529 = vmatpush2.msra.mxu0 0.0
          %530 = vmatprep.subr.mxu0 0.0
          %531 = vmatpush2.msra.mxu0 0.0
          %532 = vmatprep.subr.mxu0 0.0
          %533 = vmatpush2.msra.mxu0 0.0
          %534 = vmatprep.subr.mxu0 0.0
          %535 = vmatpush2.msra.mxu0 0.0
          %536 = vmatprep.subr.mxu0 0.0
          %537 = vmatpush2.msra.mxu0 0.0
          %538 = vmatprep.subr.mxu0 0.0
          %539 = vmatpush2.msra.mxu0 0.0
          %540 = vmatprep.subr.mxu0 0.0
          %541 = vmatpush2.msra.mxu0 0.0
          %542 = vmatprep.subr.mxu0 0.0
          %543 = vmatpush2.msra.mxu0 0.0
          %544 = vmatprep.subr.mxu0 0.0
          %545 = vmatpush2.msra.mxu0 0.0
          %546 = vmatprep.subr.mxu0 0.0
          %547 = vmatpush2.msra.mxu0 0.0
          %548 = vmatprep.mubr.f32.mxu0 0.0
          %549 = vmatmul.mubr.f32.gmra.mxu0 %v466
          %v550 = vpop.f32.mrf.mxu0
          %v551 = vadd.f32 0.0, %v550
          %v552 = vpop.f32.mrf.mxu0
          %553 = vmatprep.mubr.f32.mxu0 0.0
          %554 = vmatmul.mubr.f32.gmra.mxu0 %v467
          %v555 = vpop.f32.mrf.mxu0
          %v556 = vadd.f32 0.0, %v555
          %v557 = vpop.f32.mrf.mxu0
          %558 = vdwg.mxu0
          %v559 = vld [vmem:[%s330] sm:$0xff]
          %v560 = vld [vmem:[%s330 + $0x8] sm:$0xff]
          %562 = vset.pattern.permute.xlu0 0
          %563 = vperm.xlu0 %562, %v559
          %v564 = vpop.permute.xlu0 %563
          %567 = vset.pattern.permute.xlu0 0
          %568 = vperm.xlu0 %567, %v560
          %v569 = vpop.permute.xlu0 %568
          %v571 = vmul.f32 %v551, %v564
          %v572 = vmul.f32 %v556, %v569
          %v573 = vmax.f32 %v571, 0.0
          %v574 = vmax.f32 %v572, 0.0
          %575 = vst [vmem:[%s310] sm:$0xff] %v573
          %576 = vst [vmem:[%s310 + $0x8] sm:$0xff] %v574
        $region52: #{tpu_custom_call.1} parent=35 // pred_fallthru
          _
        %s577 = sand.u32 %s158, 1
        %s578 = scalar_lea.sflag [#allocation5], %s577
        %s579 = sand.u32 %s158, 1
        %s580 = smul.addr %s579, 16
        %s581 = scalar_lea.vmem [#allocation8], %s580
        // Predicated region
        $region53: #{tpu_custom_call.1} parent=35 // pred_check
          %p582 = pneg %p168
        $region54: #{tpu_custom_call.1} parent=35 // pred_check_branch
          %584 = sbr.rel (%p582) target = $region56
        $region55: #{tpu_custom_call.1} parent=35 // pred_region
          %s585 = smul.u32 2, %s28
          %s587 = ssub.s32 256, 256
          %588 = vsyncadd %s578, %s587
          %s589 = smul.addr %s27, 2
          %s590 = sadd.s32 %s585, %s589
          %s591 = smul.addr %s590, 128
          %s592 = scalar_lea.hbm %s4, %s591
          %s593 = sshll.u32 %s581, 4
          %s594 = int_to_ptr.vmem [resolvable:$true] %s593
          %599 = dma.vmem_to_hbm [thread:$0]  %s594, 256, %s592, %s578, 128, 128, 8
        $region56: #{tpu_custom_call.1} parent=35 // pred_fallthru
          _
      $region36: #{tpu_custom_call.1} parent=5 // pred_fallthru
        _
      %p600 = scmp.le.s32.totalorder 2, %s17
      // Predicated region
      $region57: #{tpu_custom_call.1} parent=5 // pred_check
        %p601 = pneg %p600
      $region58: #{tpu_custom_call.1} parent=5 // pred_check_branch
        %603 = sbr.rel (%p601) target = $region60
      $region59: #{tpu_custom_call.1} parent=5 // pred_region
        %s604 = ssub.s32 %s17, 2
        // Predicated region
        $region61: #{tpu_custom_call.1} parent=59 // pred_check
          %p605 = pneg %p174
        $region62: #{tpu_custom_call.1} parent=59 // pred_check_branch
          %607 = sbr.rel (%p605) target = $region64
        $region63: #{tpu_custom_call.1} parent=59 // pred_region
          %s608 = sand.u32 %s159, 1
          %s609 = scalar_lea.sflag [#allocation5], %s608
          %s610 = sand.u32 %s159, 1
          %s611 = smul.addr %s610, 16
          %s612 = scalar_lea.vmem [#allocation8], %s611
          %613 = dma.done %s609, 256
        $region64: #{tpu_custom_call.1} parent=59 // pred_fallthru
          _
      $region60: #{tpu_custom_call.1} parent=5 // pred_fallthru
        _
    $region6: #{tpu_custom_call.1} parent=1 // loop_footer
      %s21 = sadd.s32 1, %s17
    $region7: #{tpu_custom_call.1} parent=1 // loop_footer_branch
      %16 = sbr.rel target = $region3
    $region8: #{tpu_custom_call.1} parent=1 // loop_exit
      _
    %614 = vsyncpa [#allocation4], 1
    %s615 = scalar_lea.sflag [#allocation4], 1
    %616 = vsyncpa %s615, 1
    %617 = vsyncpa [#allocation7], 1
    %618 = vsyncpa [#allocation5], 1
    %s619 = scalar_lea.sflag [#allocation5], 1
    %620 = vsyncpa %s619, 1

</llo_original>
